<compile_context>
chip_gen: v7x
topology: tpu7x:2x2x1
jax: 0.10.0
libtpu: 0.0.40
codegen_flags: <defaults>
</compile_context>

<pallas_src>
import functools

import jax
import jax.numpy as jnp
from jax.experimental import pallas as pl
from jax.experimental.pallas import tpu as pltpu


# -----------------------------------------------------------------------------
# Fused kernel.
#   refs = [w_c0, b_c0, ..., w_cL-1, b_cL-1,   conv params: (K, Cin, Cout), (1, Cout)
#           w_n0, b_n0, ..., w_nM-1, b_nM-1,   linear params: (Din, Dout), (1, Dout)
#           o_ref]                             output block (NB, 1, Dout)
# -----------------------------------------------------------------------------
def _convnet_fused_kernel(x_ref, *refs, conv_cfg, n_linear, NB, T, mxu_dtype):
    par = refs[:-1]
    o_ref = refs[-1]

    NBT = NB * T
    cin0 = conv_cfg[0][1]
    h = x_ref[...].reshape(NBT, cin0).astype(jnp.float32)       # (NB*T, Cin0)

    # Per-row time index (within each sample) for the 'same'-padding halo mask.
    # Computed once; T=power-of-two makes the mod a bitwise AND.
    t_idx = jax.lax.broadcasted_iota(jnp.int32, (NBT, 1), 0) % T

    # ---- conv blocks: K shifted micro-dots accumulated in f32 (no im2col) ----
    p = 0
    for (K, Cin, Cout) in conv_cfg:
        w_ref, b_ref = par[p], par[p + 1]
        p += 2
        pad_l = (K - 1) // 2                     # torch 'same': extra pad on the right
        acc = jnp.zeros((NBT, Cout), jnp.float32) + b_ref[...]   # bias, hoisted
        for k in range(K):
            d = k - pad_l                        # source time offset for this tap
            if d == 0:
                hk = h
            else:
                shifted = pltpu.roll(h, shift=(-d) % NBT, axis=0)    # row r <- h[r+d]
                # valid iff 0 <= t + d < T; rows that wrapped across a sample (or the
                # whole array) fall outside this range and are zeroed -> 'same' padding.
                valid = (t_idx >= max(0, -d)) & (t_idx < min(T, T - d))
                hk = jnp.where(valid, shifted, 0.0)
            acc += jnp.dot(hk.astype(mxu_dtype), w_ref[k],
                           preferred_element_type=jnp.float32)
        h = jnp.maximum(acc, 0.0)                # (NB*T, Cout), f32

    # ---- mean pool over time: sublane reduce (no pooling-matrix matmul) ----
    c_last = conv_cfg[-1][2]
    y = h.reshape(NB, T, c_last).sum(axis=1) * jnp.float32(1.0 / T)   # (NB, C_last)

    # ---- MLP ----
    for i in range(n_linear):
        w_ref, b_ref = par[p], par[p + 1]
        p += 2
        y = jnp.dot(y.astype(mxu_dtype), w_ref[...],
                    preferred_element_type=jnp.float32) + b_ref[...]
        if i < n_linear - 1:
            y = jnp.maximum(y, 0.0)

    o_ref[...] = y.reshape(o_ref.shape).astype(o_ref.dtype)


# -----------------------------------------------------------------------------
# Wrapper: one pallas_call for the whole forward, optional batch grid axis.
# -----------------------------------------------------------------------------
def convnet_forward(params, x_nct, *, mxu_dtype=jnp.bfloat16, batch_block=None):
    """x_nct: (N, Cin, T) like the PyTorch module. Returns (N, Dout) ((Dout,) if N==1)."""
    N, cin0, T = x_nct.shape
    if batch_block is None:
        batch_block = N                      # one block: optimal at toy sizes
    assert N % batch_block == 0
    NB = batch_block

    # Channels-last; channels ride the 128-lane axis inside the kernel.
    x = jnp.transpose(x_nct, (0, 2, 1)).astype(jnp.float32)      # (N, T, Cin)

    conv_cfg = []
    flat = [x]
    in_specs = [pl.BlockSpec((NB, T, cin0), lambda i: (i, 0, 0))]
    for (w, b) in params["conv"]:
        K, cin, cout = w.shape
        conv_cfg.append((K, cin, cout))
        flat += [w.astype(mxu_dtype), b.reshape(1, cout).astype(jnp.float32)]
        in_specs += [pl.BlockSpec((K, cin, cout), lambda i: (0, 0, 0)),
                     pl.BlockSpec((1, cout), lambda i: (0, 0))]
    for (w, b) in params["net"]:
        din, dout = w.shape
        flat += [w.astype(mxu_dtype), b.reshape(1, dout).astype(jnp.float32)]
        in_specs += [pl.BlockSpec((din, dout), lambda i: (0, 0)),
                     pl.BlockSpec((1, dout), lambda i: (0, 0))]

    dout_final = params["net"][-1][0].shape[1]
    n_linear = len(params["net"])

    kernel = functools.partial(_convnet_fused_kernel, conv_cfg=tuple(conv_cfg),
                               n_linear=n_linear, NB=NB, T=T, mxu_dtype=mxu_dtype)
    out = pl.pallas_call(
        kernel,
        # 3D output so a batch tile of any size keeps the (8,128)-legal minor dims.
        out_shape=jax.ShapeDtypeStruct((N, 1, dout_final), jnp.float32),
        grid=(N // NB,),
        in_specs=in_specs,
        out_specs=pl.BlockSpec((NB, 1, dout_final), lambda i: (i, 0, 0)),
        compiler_params=pltpu.CompilerParams(
            dimension_semantics=("parallel",)),   # megacore / v7x dual-TC friendly
    )(*flat)

    out = out.reshape(N, dout_final)
    if N == 1:  # mirror torch `.squeeze()` on the pooled tensor for batch size 1
        out = out[0]
    return out


# -----------------------------------------------------------------------------
# Parameter init.  Conv weights are stored as (K, Cin, Cout); from a torch Conv1d
# weight (Cout, Cin, K) this is w.permute(2, 1, 0).
# -----------------------------------------------------------------------------
def init_params(key, convolutional_layers, kernel_sizes, net_layers):
    params = {"conv": [], "net": []}
    for cin, cout, k in zip(convolutional_layers, convolutional_layers[1:],
                            kernel_sizes):
        key, kw, kb = jax.random.split(key, 3)
        scale = 1.0 / (cin * k) ** 0.5
        w = jax.random.uniform(kw, (k, cin, cout), jnp.float32, -scale, scale)
        b = jax.random.uniform(kb, (cout,), jnp.float32, -scale, scale)
        params["conv"].append((w, b))
    for din, dout in zip(net_layers, net_layers[1:]):
        key, kw, kb = jax.random.split(key, 3)
        scale = 1.0 / din ** 0.5
        w = jax.random.uniform(kw, (din, dout), jnp.float32, -scale, scale)
        b = jax.random.uniform(kb, (dout,), jnp.float32, -scale, scale)
        params["net"].append((w, b))
    return params


# -----------------------------------------------------------------------------
# Pure-JAX reference (torch semantics: Conv1d 'same' + ReLU, mean over T, MLP).
# -----------------------------------------------------------------------------
def _reference_forward(params, x_nct):
    x = jnp.transpose(x_nct, (0, 2, 1)).astype(jnp.float32)     # (N, T, Cin)
    T = x.shape[1]
    for (w, b) in params["conv"]:
        K, cin, cout = w.shape
        pad_l = (K - 1) // 2
        xp = jnp.pad(x, ((0, 0), (pad_l, K - 1 - pad_l), (0, 0)))
        acc = jnp.zeros((x.shape[0], T, cout), jnp.float32)
        for k in range(K):
            acc = acc + jnp.einsum("ntc,cd->ntd", xp[:, k:k + T, :], w[k],
                                   precision=jax.lax.Precision.HIGHEST)
        x = jnp.maximum(acc + b, 0.0)
    y = x.mean(axis=1)
    for i, (w, b) in enumerate(params["net"]):
        y = jnp.dot(y, w, precision=jax.lax.Precision.HIGHEST) + b
        if i < len(params["net"]) - 1:
            y = jnp.maximum(y, 0.0)
    if y.shape[0] == 1:
        y = y[0]
    return y


if __name__ == "__main__":
    convolutional_layers = [4, 8, 16]
    kernel_sizes = [3, 3]
    net_layers = [16, 32, 10]
    N, T = 2, 16

    key = jax.random.PRNGKey(0)
    key, kx = jax.random.split(key)
    x = jax.random.normal(kx, (N, convolutional_layers[0], T), jnp.float32)
    params = init_params(key, convolutional_layers, kernel_sizes, net_layers)

    ref = jax.block_until_ready(_reference_forward(params, x))

    # 1) f32-operand MXU path: tight check of roll/mask indexing + pooling math.
    out_f32 = jax.block_until_ready(convnet_forward(params, x, mxu_dtype=jnp.float32))
    assert out_f32.shape == (N, net_layers[-1]), out_f32.shape
    assert jnp.allclose(out_f32, ref, atol=1e-3, rtol=1e-3), (
        float(jnp.max(jnp.abs(out_f32 - ref))))

    # 2) Default bf16-operand / f32-accumulate path (looser tolerance for bf16 operands).
    out_bf16 = jax.block_until_ready(convnet_forward(params, x))
    assert out_bf16.shape == (N, net_layers[-1]), out_bf16.shape
    assert jnp.allclose(out_bf16, ref, atol=3e-2, rtol=3e-2), (
        float(jnp.max(jnp.abs(out_bf16 - ref))))

    # 3) Batch-tiled path: exercises the "parallel" batch grid axis (grid=(N,)).
    out_tiled = jax.block_until_ready(convnet_forward(params, x, batch_block=1))
    assert jnp.allclose(out_tiled, ref, atol=3e-2, rtol=3e-2), (
        float(jnp.max(jnp.abs(out_tiled - ref))))

    print("KERNEL_OK")
</pallas_src>

<mosaic_0001>
module attributes {stable_mosaic.version = 11 : i64} {
  func.func @_convnet_fused_kernel(%arg0: i32, %arg1: memref<2x16x4xf32, #tpu.memory_space<vmem>>, %arg2: memref<3x4x8xf32, #tpu.memory_space<vmem>>, %arg3: memref<1x8xf32, #tpu.memory_space<vmem>>, %arg4: memref<3x8x16xf32, #tpu.memory_space<vmem>>, %arg5: memref<1x16xf32, #tpu.memory_space<vmem>>, %arg6: memref<16x32xf32, #tpu.memory_space<vmem>>, %arg7: memref<1x32xf32, #tpu.memory_space<vmem>>, %arg8: memref<32x10xf32, #tpu.memory_space<vmem>>, %arg9: memref<1x10xf32, #tpu.memory_space<vmem>>, %arg10: memref<2x1x10xf32, #tpu.memory_space<vmem>>) attributes {dimension_semantics = [#tpu.dimension_semantics<parallel>], iteration_bounds = array<i64: 1>, scalar_prefetch = 0 : i64, scratch_operands = 0 : i64, tpu.core_type = #tpu.core_type<tc>, window_params = [{transform_indices = @transform_0, window_bounds = array<i64: 2, 16, 4>}, {pipeline_mode = #tpu.pipeline_mode<synchronous>, transform_indices = @transform_1, window_bounds = array<i64: 3, 4, 8>}, {pipeline_mode = #tpu.pipeline_mode<synchronous>, transform_indices = @transform_2, window_bounds = array<i64: 1, 8>}, {pipeline_mode = #tpu.pipeline_mode<synchronous>, transform_indices = @transform_3, window_bounds = array<i64: 3, 8, 16>}, {pipeline_mode = #tpu.pipeline_mode<synchronous>, transform_indices = @transform_4, window_bounds = array<i64: 1, 16>}, {pipeline_mode = #tpu.pipeline_mode<synchronous>, transform_indices = @transform_5, window_bounds = array<i64: 16, 32>}, {pipeline_mode = #tpu.pipeline_mode<synchronous>, transform_indices = @transform_6, window_bounds = array<i64: 1, 32>}, {pipeline_mode = #tpu.pipeline_mode<synchronous>, transform_indices = @transform_7, window_bounds = array<i64: 32, 10>}, {pipeline_mode = #tpu.pipeline_mode<synchronous>, transform_indices = @transform_8, window_bounds = array<i64: 1, 10>}, {transform_indices = @transform_9, window_bounds = array<i64: 2, 1, 10>}]} {
    %c0 = arith.constant 0 : index
    %c0_0 = arith.constant 0 : index
    %c0_1 = arith.constant 0 : index
    %0 = vector.load %arg1[%c0, %c0_0, %c0_1] : memref<2x16x4xf32, #tpu.memory_space<vmem>>, vector<2x16x4xf32>
    %1 = vector.shape_cast %0 : vector<2x16x4xf32> to vector<32x4xf32>
    %2 = tpu.iota {dimensions = array<i32: 0>} : vector<32x1xi32>
    %c16_i32 = arith.constant 16 : i32
    %c0_i32 = arith.constant 0 : i32
    %3 = arith.cmpi eq, %c16_i32, %c0_i32 : i32
    %c1_i32 = arith.constant 1 : i32
    %4 = arith.select %3, %c1_i32, %c16_i32 : i32
    %5 = vector.broadcast %4 : i32 to vector<32x1xi32>
    %6 = arith.remsi %2, %5 : vector<32x1xi32>
    %c0_i32_2 = arith.constant 0 : i32
    %7 = vector.broadcast %c0_i32_2 : i32 to vector<32x1xi32>
    %8 = arith.cmpi ne, %6, %7 : vector<32x1xi32>
    %c0_i32_3 = arith.constant 0 : i32
    %9 = vector.broadcast %c0_i32_3 : i32 to vector<32x1xi32>
    %10 = arith.cmpi slt, %6, %9 : vector<32x1xi32>
    %c0_i32_4 = arith.constant 0 : i32
    %11 = arith.cmpi slt, %4, %c0_i32_4 : i32
    %12 = vector.broadcast %11 : i1 to vector<32x1xi1>
    %13 = vector.broadcast %12 : vector<32x1xi1> to vector<32x1xi1>
    %14 = arith.xori %10, %13 : vector<32x1xi1>
    %15 = arith.andi %14, %8 : vector<32x1xi1>
    %16 = vector.broadcast %4 : i32 to vector<32x1xi32>
    %17 = arith.addi %6, %16 : vector<32x1xi32>
    %18 = arith.select %15, %17, %6 : vector<32x1xi1>, vector<32x1xi32>
    %cst = arith.constant 0.000000e+00 : f32
    %19 = vector.broadcast %cst : f32 to vector<32x8xf32>
    %c0_5 = arith.constant 0 : index
    %c0_6 = arith.constant 0 : index
    %20 = vector.load %arg3[%c0_5, %c0_6] : memref<1x8xf32, #tpu.memory_space<vmem>>, vector<1x8xf32>
    %21 = vector.broadcast %20 : vector<1x8xf32> to vector<32x8xf32>
    %22 = arith.addf %19, %21 : vector<32x8xf32>
    %c1_i32_7 = arith.constant 1 : i32
    %23 = tpu.dynamic_rotate %1 by %c1_i32_7 dim 0 : vector<32x4xf32>, i32 -> vector<32x4xf32>
    %c1_i32_8 = arith.constant 1 : i32
    %24 = vector.broadcast %c1_i32_8 : i32 to vector<32x1xi32>
    %25 = arith.cmpi sge, %18, %24 : vector<32x1xi32>
    %c16_i32_9 = arith.constant 16 : i32
    %26 = vector.broadcast %c16_i32_9 : i32 to vector<32x1xi32>
    %27 = arith.cmpi slt, %18, %26 : vector<32x1xi32>
    %28 = arith.andi %25, %27 : vector<32x1xi1>
    %cst_10 = arith.constant 0.000000e+00 : f32
    %29 = vector.shape_cast %28 : vector<32x1xi1> to vector<32x1xi1>
    %30 = vector.broadcast %29 : vector<32x1xi1> to vector<32x4xi1>
    %31 = vector.broadcast %cst_10 : f32 to vector<32x4xf32>
    %32 = arith.select %30, %23, %31 : vector<32x4xi1>, vector<32x4xf32>
    %c0_11 = arith.constant 0 : index
    %c0_12 = arith.constant 0 : index
    %c0_13 = arith.constant 0 : index
    %33 = vector.load %arg2[%c0_11, %c0_12, %c0_13] : memref<3x4x8xf32, #tpu.memory_space<vmem>>, vector<1x4x8xf32>
    %34 = vector.shape_cast %33 : vector<1x4x8xf32> to vector<4x8xf32>
    %cst_14 = arith.constant dense<0.000000e+00> : vector<32x8xf32>
    %35 = tpu.matmul %32, %34, %cst_14 {dimension_numbers = #tpu.dot_dimension_numbers<[1], [0], [0], [1], [0, 0, 1, 1], [], []>} : vector<32x4xf32>, vector<4x8xf32>, vector<32x8xf32> -> vector<32x8xf32>
    %36 = arith.addf %22, %35 : vector<32x8xf32>
    %c1 = arith.constant 1 : index
    %c0_15 = arith.constant 0 : index
    %c0_16 = arith.constant 0 : index
    %37 = vector.load %arg2[%c1, %c0_15, %c0_16] : memref<3x4x8xf32, #tpu.memory_space<vmem>>, vector<1x4x8xf32>
    %38 = vector.shape_cast %37 : vector<1x4x8xf32> to vector<4x8xf32>
    %cst_17 = arith.constant dense<0.000000e+00> : vector<32x8xf32>
    %39 = tpu.matmul %1, %38, %cst_17 {dimension_numbers = #tpu.dot_dimension_numbers<[1], [0], [0], [1], [0, 0, 1, 1], [], []>} : vector<32x4xf32>, vector<4x8xf32>, vector<32x8xf32> -> vector<32x8xf32>
    %40 = arith.addf %36, %39 : vector<32x8xf32>
    %c31_i32 = arith.constant 31 : i32
    %41 = tpu.dynamic_rotate %1 by %c31_i32 dim 0 : vector<32x4xf32>, i32 -> vector<32x4xf32>
    %c0_i32_18 = arith.constant 0 : i32
    %42 = vector.broadcast %c0_i32_18 : i32 to vector<32x1xi32>
    %43 = arith.cmpi sge, %18, %42 : vector<32x1xi32>
    %c15_i32 = arith.constant 15 : i32
    %44 = vector.broadcast %c15_i32 : i32 to vector<32x1xi32>
    %45 = arith.cmpi slt, %18, %44 : vector<32x1xi32>
    %46 = arith.andi %43, %45 : vector<32x1xi1>
    %cst_19 = arith.constant 0.000000e+00 : f32
    %47 = vector.shape_cast %46 : vector<32x1xi1> to vector<32x1xi1>
    %48 = vector.broadcast %47 : vector<32x1xi1> to vector<32x4xi1>
    %49 = vector.broadcast %cst_19 : f32 to vector<32x4xf32>
    %50 = arith.select %48, %41, %49 : vector<32x4xi1>, vector<32x4xf32>
    %c2 = arith.constant 2 : index
    %c0_20 = arith.constant 0 : index
    %c0_21 = arith.constant 0 : index
    %51 = vector.load %arg2[%c2, %c0_20, %c0_21] : memref<3x4x8xf32, #tpu.memory_space<vmem>>, vector<1x4x8xf32>
    %52 = vector.shape_cast %51 : vector<1x4x8xf32> to vector<4x8xf32>
    %cst_22 = arith.constant dense<0.000000e+00> : vector<32x8xf32>
    %53 = tpu.matmul %50, %52, %cst_22 {dimension_numbers = #tpu.dot_dimension_numbers<[1], [0], [0], [1], [0, 0, 1, 1], [], []>} : vector<32x4xf32>, vector<4x8xf32>, vector<32x8xf32> -> vector<32x8xf32>
    %54 = arith.addf %40, %53 : vector<32x8xf32>
    %cst_23 = arith.constant 0.000000e+00 : f32
    %55 = vector.broadcast %cst_23 : f32 to vector<32x8xf32>
    %56 = arith.maximumf %54, %55 : vector<32x8xf32>
    %cst_24 = arith.constant 0.000000e+00 : f32
    %57 = vector.broadcast %cst_24 : f32 to vector<32x16xf32>
    %c0_25 = arith.constant 0 : index
    %c0_26 = arith.constant 0 : index
    %58 = vector.load %arg5[%c0_25, %c0_26] : memref<1x16xf32, #tpu.memory_space<vmem>>, vector<1x16xf32>
    %59 = vector.broadcast %58 : vector<1x16xf32> to vector<32x16xf32>
    %60 = arith.addf %57, %59 : vector<32x16xf32>
    %c1_i32_27 = arith.constant 1 : i32
    %61 = tpu.dynamic_rotate %56 by %c1_i32_27 dim 0 : vector<32x8xf32>, i32 -> vector<32x8xf32>
    %c1_i32_28 = arith.constant 1 : i32
    %62 = vector.broadcast %c1_i32_28 : i32 to vector<32x1xi32>
    %63 = arith.cmpi sge, %18, %62 : vector<32x1xi32>
    %c16_i32_29 = arith.constant 16 : i32
    %64 = vector.broadcast %c16_i32_29 : i32 to vector<32x1xi32>
    %65 = arith.cmpi slt, %18, %64 : vector<32x1xi32>
    %66 = arith.andi %63, %65 : vector<32x1xi1>
    %cst_30 = arith.constant 0.000000e+00 : f32
    %67 = vector.shape_cast %66 : vector<32x1xi1> to vector<32x1xi1>
    %68 = vector.broadcast %67 : vector<32x1xi1> to vector<32x8xi1>
    %69 = vector.broadcast %cst_30 : f32 to vector<32x8xf32>
    %70 = arith.select %68, %61, %69 : vector<32x8xi1>, vector<32x8xf32>
    %c0_31 = arith.constant 0 : index
    %c0_32 = arith.constant 0 : index
    %c0_33 = arith.constant 0 : index
    %71 = vector.load %arg4[%c0_31, %c0_32, %c0_33] : memref<3x8x16xf32, #tpu.memory_space<vmem>>, vector<1x8x16xf32>
    %72 = vector.shape_cast %71 : vector<1x8x16xf32> to vector<8x16xf32>
    %cst_34 = arith.constant dense<0.000000e+00> : vector<32x16xf32>
    %73 = tpu.matmul %70, %72, %cst_34 {dimension_numbers = #tpu.dot_dimension_numbers<[1], [0], [0], [1], [0, 0, 1, 1], [], []>} : vector<32x8xf32>, vector<8x16xf32>, vector<32x16xf32> -> vector<32x16xf32>
    %74 = arith.addf %60, %73 : vector<32x16xf32>
    %c1_35 = arith.constant 1 : index
    %c0_36 = arith.constant 0 : index
    %c0_37 = arith.constant 0 : index
    %75 = vector.load %arg4[%c1_35, %c0_36, %c0_37] : memref<3x8x16xf32, #tpu.memory_space<vmem>>, vector<1x8x16xf32>
    %76 = vector.shape_cast %75 : vector<1x8x16xf32> to vector<8x16xf32>
    %cst_38 = arith.constant dense<0.000000e+00> : vector<32x16xf32>
    %77 = tpu.matmul %56, %76, %cst_38 {dimension_numbers = #tpu.dot_dimension_numbers<[1], [0], [0], [1], [0, 0, 1, 1], [], []>} : vector<32x8xf32>, vector<8x16xf32>, vector<32x16xf32> -> vector<32x16xf32>
    %78 = arith.addf %74, %77 : vector<32x16xf32>
    %c31_i32_39 = arith.constant 31 : i32
    %79 = tpu.dynamic_rotate %56 by %c31_i32_39 dim 0 : vector<32x8xf32>, i32 -> vector<32x8xf32>
    %c0_i32_40 = arith.constant 0 : i32
    %80 = vector.broadcast %c0_i32_40 : i32 to vector<32x1xi32>
    %81 = arith.cmpi sge, %18, %80 : vector<32x1xi32>
    %c15_i32_41 = arith.constant 15 : i32
    %82 = vector.broadcast %c15_i32_41 : i32 to vector<32x1xi32>
    %83 = arith.cmpi slt, %18, %82 : vector<32x1xi32>
    %84 = arith.andi %81, %83 : vector<32x1xi1>
    %cst_42 = arith.constant 0.000000e+00 : f32
    %85 = vector.shape_cast %84 : vector<32x1xi1> to vector<32x1xi1>
    %86 = vector.broadcast %85 : vector<32x1xi1> to vector<32x8xi1>
    %87 = vector.broadcast %cst_42 : f32 to vector<32x8xf32>
    %88 = arith.select %86, %79, %87 : vector<32x8xi1>, vector<32x8xf32>
    %c2_43 = arith.constant 2 : index
    %c0_44 = arith.constant 0 : index
    %c0_45 = arith.constant 0 : index
    %89 = vector.load %arg4[%c2_43, %c0_44, %c0_45] : memref<3x8x16xf32, #tpu.memory_space<vmem>>, vector<1x8x16xf32>
    %90 = vector.shape_cast %89 : vector<1x8x16xf32> to vector<8x16xf32>
    %cst_46 = arith.constant dense<0.000000e+00> : vector<32x16xf32>
    %91 = tpu.matmul %88, %90, %cst_46 {dimension_numbers = #tpu.dot_dimension_numbers<[1], [0], [0], [1], [0, 0, 1, 1], [], []>} : vector<32x8xf32>, vector<8x16xf32>, vector<32x16xf32> -> vector<32x16xf32>
    %92 = arith.addf %78, %91 : vector<32x16xf32>
    %cst_47 = arith.constant 0.000000e+00 : f32
    %93 = vector.broadcast %cst_47 : f32 to vector<32x16xf32>
    %94 = arith.maximumf %92, %93 : vector<32x16xf32>
    %95 = vector.shape_cast %94 : vector<32x16xf32> to vector<2x16x16xf32>
    %cst_48 = arith.constant dense<0.000000e+00> : vector<2x16xf32>
    %96 = vector.multi_reduction <add>, %95, %cst_48 [1] : vector<2x16x16xf32> to vector<2x16xf32>
    %cst_49 = arith.constant 6.250000e-02 : f32
    %97 = vector.broadcast %cst_49 : f32 to vector<2x16xf32>
    %98 = arith.mulf %96, %97 : vector<2x16xf32>
    %c0_50 = arith.constant 0 : index
    %c0_51 = arith.constant 0 : index
    %99 = vector.load %arg6[%c0_50, %c0_51] : memref<16x32xf32, #tpu.memory_space<vmem>>, vector<16x32xf32>
    %cst_52 = arith.constant dense<0.000000e+00> : vector<2x32xf32>
    %100 = tpu.matmul %98, %99, %cst_52 {dimension_numbers = #tpu.dot_dimension_numbers<[1], [0], [0], [1], [0, 0, 1, 1], [], []>} : vector<2x16xf32>, vector<16x32xf32>, vector<2x32xf32> -> vector<2x32xf32>
    %c0_53 = arith.constant 0 : index
    %c0_54 = arith.constant 0 : index
    %101 = vector.load %arg7[%c0_53, %c0_54] : memref<1x32xf32, #tpu.memory_space<vmem>>, vector<1x32xf32>
    %102 = vector.broadcast %101 : vector<1x32xf32> to vector<2x32xf32>
    %103 = arith.addf %100, %102 : vector<2x32xf32>
    %cst_55 = arith.constant 0.000000e+00 : f32
    %104 = vector.broadcast %cst_55 : f32 to vector<2x32xf32>
    %105 = arith.maximumf %103, %104 : vector<2x32xf32>
    %c0_56 = arith.constant 0 : index
    %c0_57 = arith.constant 0 : index
    %106 = vector.load %arg8[%c0_56, %c0_57] : memref<32x10xf32, #tpu.memory_space<vmem>>, vector<32x10xf32>
    %cst_58 = arith.constant dense<0.000000e+00> : vector<2x10xf32>
    %107 = tpu.matmul %105, %106, %cst_58 {dimension_numbers = #tpu.dot_dimension_numbers<[1], [0], [0], [1], [0, 0, 1, 1], [], []>} : vector<2x32xf32>, vector<32x10xf32>, vector<2x10xf32> -> vector<2x10xf32>
    %c0_59 = arith.constant 0 : index
    %c0_60 = arith.constant 0 : index
    %108 = vector.load %arg9[%c0_59, %c0_60] : memref<1x10xf32, #tpu.memory_space<vmem>>, vector<1x10xf32>
    %109 = vector.broadcast %108 : vector<1x10xf32> to vector<2x10xf32>
    %110 = arith.addf %107, %109 : vector<2x10xf32>
    %111 = vector.shape_cast %110 : vector<2x10xf32> to vector<2x1x10xf32>
    %c0_61 = arith.constant 0 : index
    %c0_62 = arith.constant 0 : index
    %c0_63 = arith.constant 0 : index
    %112 = vector.load %arg10[%c0_61, %c0_62, %c0_63] : memref<2x1x10xf32, #tpu.memory_space<vmem>>, vector<2x1x10xf32>
    tpu.vector_store %arg10[%c0_61, %c0_62, %c0_63], %111 {strides = array<i32>} : memref<2x1x10xf32, #tpu.memory_space<vmem>>, vector<2x1x10xf32>,
    return
  }
  func.func @transform_0(%arg0: i32) -> (i32, i32, i32) {
    %c0_i32 = arith.constant 0 : i32
    %c0_i32_0 = arith.constant 0 : i32
    %c0_i32_1 = arith.constant 0 : i32
    return %arg0, %c0_i32, %c0_i32_0 : i32, i32, i32
  }
  func.func @transform_1(%arg0: i32) -> (i32, i32, i32) {
    %c0_i32 = arith.constant 0 : i32
    %c0_i32_0 = arith.constant 0 : i32
    %c0_i32_1 = arith.constant 0 : i32
    %c0_i32_2 = arith.constant 0 : i32
    return %c0_i32, %c0_i32_0, %c0_i32_1 : i32, i32, i32
  }
  func.func @transform_2(%arg0: i32) -> (i32, i32) {
    %c0_i32 = arith.constant 0 : i32
    %c0_i32_0 = arith.constant 0 : i32
    %c0_i32_1 = arith.constant 0 : i32
    return %c0_i32, %c0_i32_0 : i32, i32
  }
  func.func @transform_3(%arg0: i32) -> (i32, i32, i32) {
    %c0_i32 = arith.constant 0 : i32
    %c0_i32_0 = arith.constant 0 : i32
    %c0_i32_1 = arith.constant 0 : i32
    %c0_i32_2 = arith.constant 0 : i32
    return %c0_i32, %c0_i32_0, %c0_i32_1 : i32, i32, i32
  }
  func.func @transform_4(%arg0: i32) -> (i32, i32) {
    %c0_i32 = arith.constant 0 : i32
    %c0_i32_0 = arith.constant 0 : i32
    %c0_i32_1 = arith.constant 0 : i32
    return %c0_i32, %c0_i32_0 : i32, i32
  }
  func.func @transform_5(%arg0: i32) -> (i32, i32) {
    %c0_i32 = arith.constant 0 : i32
    %c0_i32_0 = arith.constant 0 : i32
    %c0_i32_1 = arith.constant 0 : i32
    return %c0_i32, %c0_i32_0 : i32, i32
  }
  func.func @transform_6(%arg0: i32) -> (i32, i32) {
    %c0_i32 = arith.constant 0 : i32
    %c0_i32_0 = arith.constant 0 : i32
    %c0_i32_1 = arith.constant 0 : i32
    return %c0_i32, %c0_i32_0 : i32, i32
  }
  func.func @transform_7(%arg0: i32) -> (i32, i32) {
    %c0_i32 = arith.constant 0 : i32
    %c0_i32_0 = arith.constant 0 : i32
    %c0_i32_1 = arith.constant 0 : i32
    return %c0_i32, %c0_i32_0 : i32, i32
  }
  func.func @transform_8(%arg0: i32) -> (i32, i32) {
    %c0_i32 = arith.constant 0 : i32
    %c0_i32_0 = arith.constant 0 : i32
    %c0_i32_1 = arith.constant 0 : i32
    return %c0_i32, %c0_i32_0 : i32, i32
  }
  func.func @transform_9(%arg0: i32) -> (i32, i32, i32) {
    %c0_i32 = arith.constant 0 : i32
    %c0_i32_0 = arith.constant 0 : i32
    %c0_i32_1 = arith.constant 0 : i32
    return %arg0, %c0_i32, %c0_i32_0 : i32, i32, i32
  }
}

</mosaic_0001>

<llo_original>
// kernel: tpu_custom_call.1
$region0: #{tpu_custom_call.1}
  #allocation0 [shape = 'u32[]', space=smem, size = 0x4, offset = 0x4, fixed_abs, tag = 'smem constant byte address 0x4 - core index']
  #allocation1 [shape = 'u32[144,128]{1,0:T(1,128)}', space=vmem, size = 0x12000, scoped, tag = 'internal scratch']
  %s0 = inlined_call_operand.vmem [shape: f32[2,16,4], index: 0, kind: input, shape index: {}]
  %s1 = inlined_call_operand.vmem [shape: f32[3,4,8], index: 1, kind: input, shape index: {}]
  %s2 = inlined_call_operand.vmem [shape: f32[1,8], index: 2, kind: input, shape index: {}]
  %s3 = inlined_call_operand.vmem [shape: f32[3,8,16], index: 3, kind: input, shape index: {}]
  %s4 = inlined_call_operand.vmem [shape: f32[1,16], index: 4, kind: input, shape index: {}]
  %s5 = inlined_call_operand.vmem [shape: f32[16,32], index: 5, kind: input, shape index: {}]
  %s6 = inlined_call_operand.vmem [shape: f32[1,32], index: 6, kind: input, shape index: {}]
  %s7 = inlined_call_operand.vmem [shape: f32[32,10], index: 7, kind: input, shape index: {}]
  %s8 = inlined_call_operand.vmem [shape: f32[1,10], index: 8, kind: input, shape index: {}]
  %s9 = inlined_call_operand.hbm [shape: f32[2,1,10], index: 9, kind: output, shape index: {}]
  %s10 = sld [smem:[#allocation0]]
  $region46: #{tpu_custom_call.1} parent=0
    _
  %s12 = ssub.s32 1, %s10
  %s13 = scalar_select 0, %s12, %s10
  $region1: #{tpu_custom_call.1} parent=0
    #allocation2 [shape = 'u8[1024]{0}', space=vmem, size = 0x400, scoped, tag = 'output window, operand 0, single buffered']
    #allocation3 [shape = 's32[1]{0}', space=sflag, size = 0x4, scoped, tag = 'scoped memory for tpu_custom_call.1']
    %14 = vsyncpa [#allocation3], 0
    // Predicated region
    $region2: #{tpu_custom_call.1} parent=1 // pred_check
      _
    $region3: #{tpu_custom_call.1} parent=1 // pred_check_branch
      %16 = sbr.rel (0) target = $region5
    $region4: #{tpu_custom_call.1} parent=1 // pred_region
      _
    $region5: #{tpu_custom_call.1} parent=1 // pred_fallthru
      _
    // Predicated region
    $region6: #{tpu_custom_call.1} parent=1 // pred_check
      _
    $region7: #{tpu_custom_call.1} parent=1 // pred_check_branch
      %18 = sbr.rel (0) target = $region9
    $region8: #{tpu_custom_call.1} parent=1 // pred_region
      _
    $region9: #{tpu_custom_call.1} parent=1 // pred_fallthru
      _
    // Predicated region
    $region10: #{tpu_custom_call.1} parent=1 // pred_check
      _
    $region11: #{tpu_custom_call.1} parent=1 // pred_check_branch
      %20 = sbr.rel (0) target = $region13
    $region12: #{tpu_custom_call.1} parent=1 // pred_region
      _
    $region13: #{tpu_custom_call.1} parent=1 // pred_fallthru
      _
    // Predicated region
    $region14: #{tpu_custom_call.1} parent=1 // pred_check
      _
    $region15: #{tpu_custom_call.1} parent=1 // pred_check_branch
      %22 = sbr.rel (0) target = $region17
    $region16: #{tpu_custom_call.1} parent=1 // pred_region
      _
    $region17: #{tpu_custom_call.1} parent=1 // pred_fallthru
      _
    // Predicated region
    $region18: #{tpu_custom_call.1} parent=1 // pred_check
      _
    $region19: #{tpu_custom_call.1} parent=1 // pred_check_branch
      %24 = sbr.rel (0) target = $region21
    $region20: #{tpu_custom_call.1} parent=1 // pred_region
      _
    $region21: #{tpu_custom_call.1} parent=1 // pred_fallthru
      _
    // Predicated region
    $region22: #{tpu_custom_call.1} parent=1 // pred_check
      _
    $region23: #{tpu_custom_call.1} parent=1 // pred_check_branch
      %26 = sbr.rel (0) target = $region25
    $region24: #{tpu_custom_call.1} parent=1 // pred_region
      _
    $region25: #{tpu_custom_call.1} parent=1 // pred_fallthru
      _
    // Predicated region
    $region26: #{tpu_custom_call.1} parent=1 // pred_check
      _
    $region27: #{tpu_custom_call.1} parent=1 // pred_check_branch
      %28 = sbr.rel (0) target = $region29
    $region28: #{tpu_custom_call.1} parent=1 // pred_region
      _
    $region29: #{tpu_custom_call.1} parent=1 // pred_fallthru
      _
    // Predicated region
    $region30: #{tpu_custom_call.1} parent=1 // pred_check
      _
    $region31: #{tpu_custom_call.1} parent=1 // pred_check_branch
      %30 = sbr.rel (0) target = $region33
    $region32: #{tpu_custom_call.1} parent=1 // pred_region
      _
    $region33: #{tpu_custom_call.1} parent=1 // pred_fallthru
      _
    // Predicated region
    $region34: #{tpu_custom_call.1} parent=1 // pred_check
      _
    $region35: #{tpu_custom_call.1} parent=1 // pred_check_branch
      %32 = sbr.rel (0) target = $region37
    $region36: #{tpu_custom_call.1} parent=1 // pred_region
      _
    $region37: #{tpu_custom_call.1} parent=1 // pred_fallthru
      _
    %v33 = vld [vmem:[%s0] sm:$0xff]
    %v34 = vld [vmem:[%s0 + $0x8] sm:$0xff]
    %v35 = vld [vmem:[%s0 + $0x10] sm:$0xff]
    %v36 = vld [vmem:[%s0 + $0x18] sm:$0xff]
    %v37 = vlaneseq
    %v38 = vshrl.u32 %v37, 7
    %v39 = vadd.s32 %v38, 8
    %v40 = vadd.s32 %v38, 16
    %v41 = vadd.s32 %v38, 24
    %vm42 = vcmp.lt.s32.totalorder %v38, 0
    %v43 = vsub.s32 0, %v38
    %v44 = vsel %vm42, %v43, %v38
    %v45 = vshrl.u32 %v44, 4
    %v46 = vand.u32 %v44, 15
    %v47 = vsub.s32 0, %v46
    %v48 = vsel %vm42, %v47, %v46
    %vm49 = vcmp.lt.s32.totalorder %v39, 0
    %v50 = vsub.s32 0, %v39
    %v51 = vsel %vm49, %v50, %v39
    %v52 = vshrl.u32 %v51, 4
    %v53 = vand.u32 %v51, 15
    %v54 = vsub.s32 0, %v53
    %v55 = vsel %vm49, %v54, %v53
    %vm56 = vcmp.lt.s32.totalorder %v40, 0
    %v57 = vsub.s32 0, %v40
    %v58 = vsel %vm56, %v57, %v40
    %v59 = vshrl.u32 %v58, 4
    %v60 = vand.u32 %v58, 15
    %v61 = vsub.s32 0, %v60
    %v62 = vsel %vm56, %v61, %v60
    %vm63 = vcmp.lt.s32.totalorder %v41, 0
    %v64 = vsub.s32 0, %v41
    %v65 = vsel %vm63, %v64, %v41
    %v66 = vshrl.u32 %v65, 4
    %v67 = vand.u32 %v65, 15
    %v68 = vsub.s32 0, %v67
    %v69 = vsel %vm63, %v68, %v67
    %vm70 = vcmp.ne.s32.totalorder %v48, 0
    %vm71 = vcmp.ne.s32.totalorder %v55, 0
    %vm72 = vcmp.ne.s32.totalorder %v62, 0
    %vm73 = vcmp.ne.s32.totalorder %v69, 0
    %vm74 = vcmp.lt.s32.totalorder %v48, 0
    %vm75 = vcmp.lt.s32.totalorder %v55, 0
    %vm76 = vcmp.lt.s32.totalorder %v62, 0
    %vm77 = vcmp.lt.s32.totalorder %v69, 0
    %vm78 = vmand %vm74, %vm70
    %vm79 = vmand %vm75, %vm71
    %vm80 = vmand %vm76, %vm72
    %vm81 = vmand %vm77, %vm73
    %v82 = vadd.s32 %v48, 16
    %v83 = vadd.s32 %v55, 16
    %v84 = vadd.s32 %v62, 16
    %v85 = vadd.s32 %v69, 16
    %v86 = vsel %vm78, %v82, %v48
    %v87 = vsel %vm79, %v83, %v55
    %v88 = vsel %vm80, %v84, %v62
    %v89 = vsel %vm81, %v85, %v69
    %v90 = vld [vmem:[%s2] sm:$0x1]
    %v92 = vlaneseq
    %v93 = vshrl.u32 %v92, 7
    %v94 = vsub.s32 0, %v93
    %v95 = vrot.slane %v90, %v94
    %v97 = vadd.f32 %v95, 0.0
    %v98 = vrot.slane %v33, 7
    %v99 = vrot.slane %v34, 7
    %v100 = vrot.slane %v35, 7
    %v101 = vrot.slane %v36, 7
    %vm102 = vcmp.lt.s32.totalorder %v38, 1
    %v103 = vsel %vm102, %v100, %v101
    %v104 = vsel %vm102, %v99, %v100
    %v105 = vsel %vm102, %v98, %v99
    %v106 = vsel %vm102, %v101, %v98
    %vm107 = vcmp.ge.s32.totalorder %v86, 1
    %vm108 = vcmp.ge.s32.totalorder %v87, 1
    %vm109 = vcmp.ge.s32.totalorder %v88, 1
    %vm110 = vcmp.ge.s32.totalorder %v89, 1
    %vm111 = vcmp.lt.s32.totalorder %v86, 16
    %vm112 = vcmp.lt.s32.totalorder %v87, 16
    %vm113 = vcmp.lt.s32.totalorder %v88, 16
    %vm114 = vcmp.lt.s32.totalorder %v89, 16
    %vm115 = vmand %vm107, %vm111
    %vm116 = vmand %vm108, %vm112
    %vm117 = vmand %vm109, %vm113
    %vm118 = vmand %vm110, %vm114
    %v119 = vsel %vm115, 1, 0
    %v120 = vsel %vm116, 1, 0
    %v121 = vsel %vm117, 1, 0
    %v122 = vsel %vm118, 1, 0
    %vm123 = vcmp.eq.s32.totalorder %v119, 1
    %vm124 = vcmp.eq.s32.totalorder %v120, 1
    %vm125 = vcmp.eq.s32.totalorder %v121, 1
    %vm126 = vcmp.eq.s32.totalorder %v122, 1
    %v127 = vsel %vm123, %v106, 0.0
    %v128 = vsel %vm124, %v105, 0.0
    %v129 = vsel %vm125, %v104, 0.0
    %v130 = vsel %vm126, %v103, 0.0
    %v131 = vld [vmem:[%s1] sm:$0xf]
    %vm132 = vcmask 31744
    %v134 = vsel %vm132, %v127, 0
    %v137 = vsel %vm132, %v128, 0
    %v140 = vsel %vm132, %v129, 0
    %v143 = vsel %vm132, %v130, 0
    %vm145 = vcmask 1043456
    %v147 = vsel %vm145, %v131, 0
    %149 = vmatprep.subr.mxu0 0.0
    %150 = vmatpush1.msra.mxu0 %v147
    %151 = vmatprep.subr.mxu0 0.0
    %152 = vmatpush1.msra.mxu0 0.0
    %153 = vmatprep.subr.mxu0 0.0
    %154 = vmatpush1.msra.mxu0 0.0
    %155 = vmatprep.subr.mxu0 0.0
    %156 = vmatpush1.msra.mxu0 0.0
    %157 = vmatprep.subr.mxu0 0.0
    %158 = vmatpush1.msra.mxu0 0.0
    %159 = vmatprep.subr.mxu0 0.0
    %160 = vmatpush1.msra.mxu0 0.0
    %161 = vmatprep.subr.mxu0 0.0
    %162 = vmatpush1.msra.mxu0 0.0
    %163 = vmatprep.subr.mxu0 0.0
    %164 = vmatpush1.msra.mxu0 0.0
    %165 = vmatprep.subr.mxu0 0.0
    %166 = vmatpush1.msra.mxu0 0.0
    %167 = vmatprep.subr.mxu0 0.0
    %168 = vmatpush1.msra.mxu0 0.0
    %169 = vmatprep.subr.mxu0 0.0
    %170 = vmatpush1.msra.mxu0 0.0
    %171 = vmatprep.subr.mxu0 0.0
    %172 = vmatpush1.msra.mxu0 0.0
    %173 = vmatprep.subr.mxu0 0.0
    %174 = vmatpush1.msra.mxu0 0.0
    %175 = vmatprep.subr.mxu0 0.0
    %176 = vmatpush1.msra.mxu0 0.0
    %177 = vmatprep.subr.mxu0 0.0
    %178 = vmatpush1.msra.mxu0 0.0
    %179 = vmatprep.subr.mxu0 0.0
    %180 = vmatpush1.msra.mxu0 0.0
    %181 = vmatprep.subr.mxu0 0.0
    %182 = vmatpush1.msra.mxu0 0.0
    %183 = vmatprep.subr.mxu0 0.0
    %184 = vmatpush1.msra.mxu0 0.0
    %185 = vmatprep.subr.mxu0 0.0
    %186 = vmatpush1.msra.mxu0 0.0
    %187 = vmatprep.subr.mxu0 0.0
    %188 = vmatpush1.msra.mxu0 0.0
    %189 = vmatprep.subr.mxu0 0.0
    %190 = vmatpush1.msra.mxu0 0.0
    %191 = vmatprep.subr.mxu0 0.0
    %192 = vmatpush1.msra.mxu0 0.0
    %193 = vmatprep.subr.mxu0 0.0
    %194 = vmatpush1.msra.mxu0 0.0
    %195 = vmatprep.subr.mxu0 0.0
    %196 = vmatpush1.msra.mxu0 0.0
    %197 = vmatprep.subr.mxu0 0.0
    %198 = vmatpush1.msra.mxu0 0.0
    %199 = vmatprep.subr.mxu0 0.0
    %200 = vmatpush1.msra.mxu0 0.0
    %201 = vmatprep.subr.mxu0 0.0
    %202 = vmatpush1.msra.mxu0 0.0
    %203 = vmatprep.subr.mxu0 0.0
    %204 = vmatpush1.msra.mxu0 0.0
    %205 = vmatprep.subr.mxu0 0.0
    %206 = vmatpush1.msra.mxu0 0.0
    %207 = vmatprep.subr.mxu0 0.0
    %208 = vmatpush1.msra.mxu0 0.0
    %209 = vmatprep.subr.mxu0 0.0
    %210 = vmatpush1.msra.mxu0 0.0
    %211 = vmatprep.subr.mxu0 0.0
    %212 = vmatpush1.msra.mxu0 0.0
    %213 = vmatprep.mubr.f32.mxu0 0.0
    %214 = vmatmul.mubr.f32.gmra.mrb[0].mxu0 %v134
    %v215 = vpop.f32.mrb[0].mxu0
    %v216 = vadd.f32 0.0, %v215
    %v217 = vpop.f32.mrb[0].mxu0
    %218 = vmatprep.mubr.f32.mxu0 0.0
    %219 = vmatmul.mubr.f32.gmra.mrb[0].mxu0 %v137
    %v220 = vpop.f32.mrb[0].mxu0
    %v221 = vadd.f32 0.0, %v220
    %v222 = vpop.f32.mrb[0].mxu0
    %223 = vmatprep.mubr.f32.mxu0 0.0
    %224 = vmatmul.mubr.f32.gmra.mrb[0].mxu0 %v140
    %v225 = vpop.f32.mrb[0].mxu0
    %v226 = vadd.f32 0.0, %v225
    %v227 = vpop.f32.mrb[0].mxu0
    %228 = vmatprep.mubr.f32.mxu0 0.0
    %229 = vmatmul.mubr.f32.gmra.mrb[0].mxu0 %v143
    %v230 = vpop.f32.mrb[0].mxu0
    %v231 = vadd.f32 0.0, %v230
    %v232 = vpop.f32.mrb[0].mxu0
    %233 = vdwg.mxu0
    %v234 = vadd.f32 %v97, %v216
    %v235 = vadd.f32 %v97, %v221
    %v236 = vadd.f32 %v97, %v226
    %v237 = vadd.f32 %v97, %v231
    %s238 = scalar_lea.vmem %s1, 4
    %v239 = vld [vmem:[%s238] sm:$0xf]
    %v241 = vsel %vm132, %v33, 0
    %v244 = vsel %vm132, %v34, 0
    %v247 = vsel %vm132, %v35, 0
    %v250 = vsel %vm132, %v36, 0
    %v253 = vsel %vm145, %v239, 0
    %255 = vmatprep.subr.mxu0 0.0
    %256 = vmatpush1.msra.mxu0 %v253
    %257 = vmatprep.subr.mxu0 0.0
    %258 = vmatpush1.msra.mxu0 0.0
    %259 = vmatprep.subr.mxu0 0.0
    %260 = vmatpush1.msra.mxu0 0.0
    %261 = vmatprep.subr.mxu0 0.0
    %262 = vmatpush1.msra.mxu0 0.0
    %263 = vmatprep.subr.mxu0 0.0
    %264 = vmatpush1.msra.mxu0 0.0
    %265 = vmatprep.subr.mxu0 0.0
    %266 = vmatpush1.msra.mxu0 0.0
    %267 = vmatprep.subr.mxu0 0.0
    %268 = vmatpush1.msra.mxu0 0.0
    %269 = vmatprep.subr.mxu0 0.0
    %270 = vmatpush1.msra.mxu0 0.0
    %271 = vmatprep.subr.mxu0 0.0
    %272 = vmatpush1.msra.mxu0 0.0
    %273 = vmatprep.subr.mxu0 0.0
    %274 = vmatpush1.msra.mxu0 0.0
    %275 = vmatprep.subr.mxu0 0.0
    %276 = vmatpush1.msra.mxu0 0.0
    %277 = vmatprep.subr.mxu0 0.0
    %278 = vmatpush1.msra.mxu0 0.0
    %279 = vmatprep.subr.mxu0 0.0
    %280 = vmatpush1.msra.mxu0 0.0
    %281 = vmatprep.subr.mxu0 0.0
    %282 = vmatpush1.msra.mxu0 0.0
    %283 = vmatprep.subr.mxu0 0.0
    %284 = vmatpush1.msra.mxu0 0.0
    %285 = vmatprep.subr.mxu0 0.0
    %286 = vmatpush1.msra.mxu0 0.0
    %287 = vmatprep.subr.mxu0 0.0
    %288 = vmatpush1.msra.mxu0 0.0
    %289 = vmatprep.subr.mxu0 0.0
    %290 = vmatpush1.msra.mxu0 0.0
    %291 = vmatprep.subr.mxu0 0.0
    %292 = vmatpush1.msra.mxu0 0.0
    %293 = vmatprep.subr.mxu0 0.0
    %294 = vmatpush1.msra.mxu0 0.0
    %295 = vmatprep.subr.mxu0 0.0
    %296 = vmatpush1.msra.mxu0 0.0
    %297 = vmatprep.subr.mxu0 0.0
    %298 = vmatpush1.msra.mxu0 0.0
    %299 = vmatprep.subr.mxu0 0.0
    %300 = vmatpush1.msra.mxu0 0.0
    %301 = vmatprep.subr.mxu0 0.0
    %302 = vmatpush1.msra.mxu0 0.0
    %303 = vmatprep.subr.mxu0 0.0
    %304 = vmatpush1.msra.mxu0 0.0
    %305 = vmatprep.subr.mxu0 0.0
    %306 = vmatpush1.msra.mxu0 0.0
    %307 = vmatprep.subr.mxu0 0.0
    %308 = vmatpush1.msra.mxu0 0.0
    %309 = vmatprep.subr.mxu0 0.0
    %310 = vmatpush1.msra.mxu0 0.0
    %311 = vmatprep.subr.mxu0 0.0
    %312 = vmatpush1.msra.mxu0 0.0
    %313 = vmatprep.subr.mxu0 0.0
    %314 = vmatpush1.msra.mxu0 0.0
    %315 = vmatprep.subr.mxu0 0.0
    %316 = vmatpush1.msra.mxu0 0.0
    %317 = vmatprep.subr.mxu0 0.0
    %318 = vmatpush1.msra.mxu0 0.0
    %319 = vmatprep.mubr.f32.mxu0 0.0
    %320 = vmatmul.mubr.f32.gmra.mrb[0].mxu0 %v241
    %v321 = vpop.f32.mrb[0].mxu0
    %v322 = vadd.f32 0.0, %v321
    %v323 = vpop.f32.mrb[0].mxu0
    %324 = vmatprep.mubr.f32.mxu0 0.0
    %325 = vmatmul.mubr.f32.gmra.mrb[0].mxu0 %v244
    %v326 = vpop.f32.mrb[0].mxu0
    %v327 = vadd.f32 0.0, %v326
    %v328 = vpop.f32.mrb[0].mxu0
    %329 = vmatprep.mubr.f32.mxu0 0.0
    %330 = vmatmul.mubr.f32.gmra.mrb[0].mxu0 %v247
    %v331 = vpop.f32.mrb[0].mxu0
    %v332 = vadd.f32 0.0, %v331
    %v333 = vpop.f32.mrb[0].mxu0
    %334 = vmatprep.mubr.f32.mxu0 0.0
    %335 = vmatmul.mubr.f32.gmra.mrb[0].mxu0 %v250
    %v336 = vpop.f32.mrb[0].mxu0
    %v337 = vadd.f32 0.0, %v336
    %v338 = vpop.f32.mrb[0].mxu0
    %339 = vdwg.mxu0
    %v340 = vadd.f32 %v234, %v322
    %v341 = vadd.f32 %v235, %v327
    %v342 = vadd.f32 %v236, %v332
    %v343 = vadd.f32 %v237, %v337
    %v344 = vrot.slane %v33, 1
    %v345 = vrot.slane %v34, 1
    %v346 = vrot.slane %v35, 1
    %v347 = vrot.slane %v36, 1
    %vm348 = vcmp.lt.s32.totalorder %v38, 7
    %v349 = vsel %vm348, %v346, %v347
    %v350 = vsel %vm348, %v345, %v346
    %v351 = vsel %vm348, %v344, %v345
    %v352 = vsel %vm348, %v347, %v344
    %vm353 = vcmp.ge.s32.totalorder %v86, 0
    %vm354 = vcmp.ge.s32.totalorder %v87, 0
    %vm355 = vcmp.ge.s32.totalorder %v88, 0
    %vm356 = vcmp.ge.s32.totalorder %v89, 0
    %vm357 = vcmp.lt.s32.totalorder %v86, 15
    %vm358 = vcmp.lt.s32.totalorder %v87, 15
    %vm359 = vcmp.lt.s32.totalorder %v88, 15
    %vm360 = vcmp.lt.s32.totalorder %v89, 15
    %vm361 = vmand %vm353, %vm357
    %vm362 = vmand %vm354, %vm358
    %vm363 = vmand %vm355, %vm359
    %vm364 = vmand %vm356, %vm360
    %v365 = vsel %vm361, 1, 0
    %v366 = vsel %vm362, 1, 0
    %v367 = vsel %vm363, 1, 0
    %v368 = vsel %vm364, 1, 0
    %vm369 = vcmp.eq.s32.totalorder %v365, 1
    %vm370 = vcmp.eq.s32.totalorder %v366, 1
    %vm371 = vcmp.eq.s32.totalorder %v367, 1
    %vm372 = vcmp.eq.s32.totalorder %v368, 1
    %v373 = vsel %vm369, %v351, 0.0
    %v374 = vsel %vm370, %v350, 0.0
    %v375 = vsel %vm371, %v349, 0.0
    %v376 = vsel %vm372, %v352, 0.0
    %s377 = scalar_lea.vmem %s1, 8
    %v378 = vld [vmem:[%s377] sm:$0xf]
    %v380 = vsel %vm132, %v373, 0
    %v383 = vsel %vm132, %v374, 0
    %v386 = vsel %vm132, %v375, 0
    %v389 = vsel %vm132, %v376, 0
    %v392 = vsel %vm145, %v378, 0
    %394 = vmatprep.subr.mxu0 0.0
    %395 = vmatpush1.msra.mxu0 %v392
    %396 = vmatprep.subr.mxu0 0.0
    %397 = vmatpush1.msra.mxu0 0.0
    %398 = vmatprep.subr.mxu0 0.0
    %399 = vmatpush1.msra.mxu0 0.0
    %400 = vmatprep.subr.mxu0 0.0
    %401 = vmatpush1.msra.mxu0 0.0
    %402 = vmatprep.subr.mxu0 0.0
    %403 = vmatpush1.msra.mxu0 0.0
    %404 = vmatprep.subr.mxu0 0.0
    %405 = vmatpush1.msra.mxu0 0.0
    %406 = vmatprep.subr.mxu0 0.0
    %407 = vmatpush1.msra.mxu0 0.0
    %408 = vmatprep.subr.mxu0 0.0
    %409 = vmatpush1.msra.mxu0 0.0
    %410 = vmatprep.subr.mxu0 0.0
    %411 = vmatpush1.msra.mxu0 0.0
    %412 = vmatprep.subr.mxu0 0.0
    %413 = vmatpush1.msra.mxu0 0.0
    %414 = vmatprep.subr.mxu0 0.0
    %415 = vmatpush1.msra.mxu0 0.0
    %416 = vmatprep.subr.mxu0 0.0
    %417 = vmatpush1.msra.mxu0 0.0
    %418 = vmatprep.subr.mxu0 0.0
    %419 = vmatpush1.msra.mxu0 0.0
    %420 = vmatprep.subr.mxu0 0.0
    %421 = vmatpush1.msra.mxu0 0.0
    %422 = vmatprep.subr.mxu0 0.0
    %423 = vmatpush1.msra.mxu0 0.0
    %424 = vmatprep.subr.mxu0 0.0
    %425 = vmatpush1.msra.mxu0 0.0
    %426 = vmatprep.subr.mxu0 0.0
    %427 = vmatpush1.msra.mxu0 0.0
    %428 = vmatprep.subr.mxu0 0.0
    %429 = vmatpush1.msra.mxu0 0.0
    %430 = vmatprep.subr.mxu0 0.0
    %431 = vmatpush1.msra.mxu0 0.0
    %432 = vmatprep.subr.mxu0 0.0
    %433 = vmatpush1.msra.mxu0 0.0
    %434 = vmatprep.subr.mxu0 0.0
    %435 = vmatpush1.msra.mxu0 0.0
    %436 = vmatprep.subr.mxu0 0.0
    %437 = vmatpush1.msra.mxu0 0.0
    %438 = vmatprep.subr.mxu0 0.0
    %439 = vmatpush1.msra.mxu0 0.0
    %440 = vmatprep.subr.mxu0 0.0
    %441 = vmatpush1.msra.mxu0 0.0
    %442 = vmatprep.subr.mxu0 0.0
    %443 = vmatpush1.msra.mxu0 0.0
    %444 = vmatprep.subr.mxu0 0.0
    %445 = vmatpush1.msra.mxu0 0.0
    %446 = vmatprep.subr.mxu0 0.0
    %447 = vmatpush1.msra.mxu0 0.0
    %448 = vmatprep.subr.mxu0 0.0
    %449 = vmatpush1.msra.mxu0 0.0
    %450 = vmatprep.subr.mxu0 0.0
    %451 = vmatpush1.msra.mxu0 0.0
    %452 = vmatprep.subr.mxu0 0.0
    %453 = vmatpush1.msra.mxu0 0.0
    %454 = vmatprep.subr.mxu0 0.0
    %455 = vmatpush1.msra.mxu0 0.0
    %456 = vmatprep.subr.mxu0 0.0
    %457 = vmatpush1.msra.mxu0 0.0
    %458 = vmatprep.mubr.f32.mxu0 0.0
    %459 = vmatmul.mubr.f32.gmra.mrb[0].mxu0 %v380
    %v460 = vpop.f32.mrb[0].mxu0
    %v461 = vadd.f32 0.0, %v460
    %v462 = vpop.f32.mrb[0].mxu0
    %463 = vmatprep.mubr.f32.mxu0 0.0
    %464 = vmatmul.mubr.f32.gmra.mrb[0].mxu0 %v383
    %v465 = vpop.f32.mrb[0].mxu0
    %v466 = vadd.f32 0.0, %v465
    %v467 = vpop.f32.mrb[0].mxu0
    %468 = vmatprep.mubr.f32.mxu0 0.0
    %469 = vmatmul.mubr.f32.gmra.mrb[0].mxu0 %v386
    %v470 = vpop.f32.mrb[0].mxu0
    %v471 = vadd.f32 0.0, %v470
    %v472 = vpop.f32.mrb[0].mxu0
    %473 = vmatprep.mubr.f32.mxu0 0.0
    %474 = vmatmul.mubr.f32.gmra.mrb[0].mxu0 %v389
    %v475 = vpop.f32.mrb[0].mxu0
    %v476 = vadd.f32 0.0, %v475
    %v477 = vpop.f32.mrb[0].mxu0
    %478 = vdwg.mxu0
    %v479 = vadd.f32 %v340, %v461
    %v480 = vadd.f32 %v341, %v466
    %v481 = vadd.f32 %v342, %v471
    %v482 = vadd.f32 %v343, %v476
    %v483 = vmax.f32 %v479, 0.0
    %v484 = vmax.f32 %v480, 0.0
    %v485 = vmax.f32 %v481, 0.0
    %v486 = vmax.f32 %v482, 0.0
    %v487 = vld [vmem:[%s4] sm:$0x1]
    %v489 = vlaneseq
    %v490 = vshrl.u32 %v489, 7
    %v491 = vsub.s32 0, %v490
    %v492 = vrot.slane %v487, %v491
    %v494 = vadd.f32 %v492, 0.0
    %v495 = vrot.slane %v483, 7
    %v496 = vrot.slane %v484, 7
    %v497 = vrot.slane %v485, 7
    %v498 = vrot.slane %v486, 7
    %v499 = vsel %vm102, %v497, %v498
    %v500 = vsel %vm102, %v496, %v497
    %v501 = vsel %vm102, %v495, %v496
    %v502 = vsel %vm102, %v498, %v495
    %v503 = vsel %vm123, %v502, 0.0
    %v504 = vsel %vm124, %v501, 0.0
    %v505 = vsel %vm125, %v500, 0.0
    %v506 = vsel %vm126, %v499, 0.0
    %v507 = vld [vmem:[%s3] sm:$0xff]
    %vm508 = vcmask 64512
    %v510 = vsel %vm508, %v503, 0
    %v513 = vsel %vm508, %v504, 0
    %v516 = vsel %vm508, %v505, 0
    %v519 = vsel %vm508, %v506, 0
    %521 = vmatprep.subr.mxu0 0.0
    %522 = vmatpush1.msra.mxu0 %v507
    %523 = vmatprep.subr.mxu0 0.0
    %524 = vmatpush1.msra.mxu0 0.0
    %525 = vmatprep.subr.mxu0 0.0
    %526 = vmatpush1.msra.mxu0 0.0
    %527 = vmatprep.subr.mxu0 0.0
    %528 = vmatpush1.msra.mxu0 0.0
    %529 = vmatprep.subr.mxu0 0.0
    %530 = vmatpush1.msra.mxu0 0.0
    %531 = vmatprep.subr.mxu0 0.0
    %532 = vmatpush1.msra.mxu0 0.0
    %533 = vmatprep.subr.mxu0 0.0
    %534 = vmatpush1.msra.mxu0 0.0
    %535 = vmatprep.subr.mxu0 0.0
    %536 = vmatpush1.msra.mxu0 0.0
    %537 = vmatprep.subr.mxu0 0.0
    %538 = vmatpush1.msra.mxu0 0.0
    %539 = vmatprep.subr.mxu0 0.0
    %540 = vmatpush1.msra.mxu0 0.0
    %541 = vmatprep.subr.mxu0 0.0
    %542 = vmatpush1.msra.mxu0 0.0
    %543 = vmatprep.subr.mxu0 0.0
    %544 = vmatpush1.msra.mxu0 0.0
    %545 = vmatprep.subr.mxu0 0.0
    %546 = vmatpush1.msra.mxu0 0.0
    %547 = vmatprep.subr.mxu0 0.0
    %548 = vmatpush1.msra.mxu0 0.0
    %549 = vmatprep.subr.mxu0 0.0
    %550 = vmatpush1.msra.mxu0 0.0
    %551 = vmatprep.subr.mxu0 0.0
    %552 = vmatpush1.msra.mxu0 0.0
    %553 = vmatprep.subr.mxu0 0.0
    %554 = vmatpush1.msra.mxu0 0.0
    %555 = vmatprep.subr.mxu0 0.0
    %556 = vmatpush1.msra.mxu0 0.0
    %557 = vmatprep.subr.mxu0 0.0
    %558 = vmatpush1.msra.mxu0 0.0
    %559 = vmatprep.subr.mxu0 0.0
    %560 = vmatpush1.msra.mxu0 0.0
    %561 = vmatprep.subr.mxu0 0.0
    %562 = vmatpush1.msra.mxu0 0.0
    %563 = vmatprep.subr.mxu0 0.0
    %564 = vmatpush1.msra.mxu0 0.0
    %565 = vmatprep.subr.mxu0 0.0
    %566 = vmatpush1.msra.mxu0 0.0
    %567 = vmatprep.subr.mxu0 0.0
    %568 = vmatpush1.msra.mxu0 0.0
    %569 = vmatprep.subr.mxu0 0.0
    %570 = vmatpush1.msra.mxu0 0.0
    %571 = vmatprep.subr.mxu0 0.0
    %572 = vmatpush1.msra.mxu0 0.0
    %573 = vmatprep.subr.mxu0 0.0
    %574 = vmatpush1.msra.mxu0 0.0
    %575 = vmatprep.subr.mxu0 0.0
    %576 = vmatpush1.msra.mxu0 0.0
    %577 = vmatprep.subr.mxu0 0.0
    %578 = vmatpush1.msra.mxu0 0.0
    %579 = vmatprep.subr.mxu0 0.0
    %580 = vmatpush1.msra.mxu0 0.0
    %581 = vmatprep.subr.mxu0 0.0
    %582 = vmatpush1.msra.mxu0 0.0
    %583 = vmatprep.subr.mxu0 0.0
    %584 = vmatpush1.msra.mxu0 0.0
    %585 = vmatprep.mubr.f32.mxu0 0.0
    %586 = vmatmul.mubr.f32.gmra.mrb[0].mxu0 %v510
    %v587 = vpop.f32.mrb[0].mxu0
    %v588 = vadd.f32 0.0, %v587
    %v589 = vpop.f32.mrb[0].mxu0
    %590 = vmatprep.mubr.f32.mxu0 0.0
    %591 = vmatmul.mubr.f32.gmra.mrb[0].mxu0 %v513
    %v592 = vpop.f32.mrb[0].mxu0
    %v593 = vadd.f32 0.0, %v592
    %v594 = vpop.f32.mrb[0].mxu0
    %595 = vmatprep.mubr.f32.mxu0 0.0
    %596 = vmatmul.mubr.f32.gmra.mrb[0].mxu0 %v516
    %v597 = vpop.f32.mrb[0].mxu0
    %v598 = vadd.f32 0.0, %v597
    %v599 = vpop.f32.mrb[0].mxu0
    %600 = vmatprep.mubr.f32.mxu0 0.0
    %601 = vmatmul.mubr.f32.gmra.mrb[0].mxu0 %v519
    %v602 = vpop.f32.mrb[0].mxu0
    %v603 = vadd.f32 0.0, %v602
    %v604 = vpop.f32.mrb[0].mxu0
    %605 = vdwg.mxu0
    %v606 = vadd.f32 %v494, %v588
    %v607 = vadd.f32 %v494, %v593
    %v608 = vadd.f32 %v494, %v598
    %v609 = vadd.f32 %v494, %v603
    %s610 = scalar_lea.vmem %s3, 8
    %v611 = vld [vmem:[%s610] sm:$0xff]
    %v613 = vsel %vm508, %v483, 0
    %v616 = vsel %vm508, %v484, 0
    %v619 = vsel %vm508, %v485, 0
    %v622 = vsel %vm508, %v486, 0
    %624 = vmatprep.subr.mxu0 0.0
    %625 = vmatpush1.msra.mxu0 %v611
    %626 = vmatprep.subr.mxu0 0.0
    %627 = vmatpush1.msra.mxu0 0.0
    %628 = vmatprep.subr.mxu0 0.0
    %629 = vmatpush1.msra.mxu0 0.0
    %630 = vmatprep.subr.mxu0 0.0
    %631 = vmatpush1.msra.mxu0 0.0
    %632 = vmatprep.subr.mxu0 0.0
    %633 = vmatpush1.msra.mxu0 0.0
    %634 = vmatprep.subr.mxu0 0.0
    %635 = vmatpush1.msra.mxu0 0.0
    %636 = vmatprep.subr.mxu0 0.0
    %637 = vmatpush1.msra.mxu0 0.0
    %638 = vmatprep.subr.mxu0 0.0
    %639 = vmatpush1.msra.mxu0 0.0
    %640 = vmatprep.subr.mxu0 0.0
    %641 = vmatpush1.msra.mxu0 0.0
    %642 = vmatprep.subr.mxu0 0.0
    %643 = vmatpush1.msra.mxu0 0.0
    %644 = vmatprep.subr.mxu0 0.0
    %645 = vmatpush1.msra.mxu0 0.0
    %646 = vmatprep.subr.mxu0 0.0
    %647 = vmatpush1.msra.mxu0 0.0
    %648 = vmatprep.subr.mxu0 0.0
    %649 = vmatpush1.msra.mxu0 0.0
    %650 = vmatprep.subr.mxu0 0.0
    %651 = vmatpush1.msra.mxu0 0.0
    %652 = vmatprep.subr.mxu0 0.0
    %653 = vmatpush1.msra.mxu0 0.0
    %654 = vmatprep.subr.mxu0 0.0
    %655 = vmatpush1.msra.mxu0 0.0
    %656 = vmatprep.subr.mxu0 0.0
    %657 = vmatpush1.msra.mxu0 0.0
    %658 = vmatprep.subr.mxu0 0.0
    %659 = vmatpush1.msra.mxu0 0.0
    %660 = vmatprep.subr.mxu0 0.0
    %661 = vmatpush1.msra.mxu0 0.0
    %662 = vmatprep.subr.mxu0 0.0
    %663 = vmatpush1.msra.mxu0 0.0
    %664 = vmatprep.subr.mxu0 0.0
    %665 = vmatpush1.msra.mxu0 0.0
    %666 = vmatprep.subr.mxu0 0.0
    %667 = vmatpush1.msra.mxu0 0.0
    %668 = vmatprep.subr.mxu0 0.0
    %669 = vmatpush1.msra.mxu0 0.0
    %670 = vmatprep.subr.mxu0 0.0
    %671 = vmatpush1.msra.mxu0 0.0
    %672 = vmatprep.subr.mxu0 0.0
    %673 = vmatpush1.msra.mxu0 0.0
    %674 = vmatprep.subr.mxu0 0.0
    %675 = vmatpush1.msra.mxu0 0.0
    %676 = vmatprep.subr.mxu0 0.0
    %677 = vmatpush1.msra.mxu0 0.0
    %678 = vmatprep.subr.mxu0 0.0
    %679 = vmatpush1.msra.mxu0 0.0
    %680 = vmatprep.subr.mxu0 0.0
    %681 = vmatpush1.msra.mxu0 0.0
    %682 = vmatprep.subr.mxu0 0.0
    %683 = vmatpush1.msra.mxu0 0.0
    %684 = vmatprep.subr.mxu0 0.0
    %685 = vmatpush1.msra.mxu0 0.0
    %686 = vmatprep.subr.mxu0 0.0
    %687 = vmatpush1.msra.mxu0 0.0
    %688 = vmatprep.mubr.f32.mxu0 0.0
    %689 = vmatmul.mubr.f32.gmra.mrb[0].mxu0 %v613
    %v690 = vpop.f32.mrb[0].mxu0
    %v691 = vadd.f32 0.0, %v690
    %v692 = vpop.f32.mrb[0].mxu0
    %693 = vmatprep.mubr.f32.mxu0 0.0
    %694 = vmatmul.mubr.f32.gmra.mrb[0].mxu0 %v616
    %v695 = vpop.f32.mrb[0].mxu0
    %v696 = vadd.f32 0.0, %v695
    %v697 = vpop.f32.mrb[0].mxu0
    %698 = vmatprep.mubr.f32.mxu0 0.0
    %699 = vmatmul.mubr.f32.gmra.mrb[0].mxu0 %v619
    %v700 = vpop.f32.mrb[0].mxu0
    %v701 = vadd.f32 0.0, %v700
    %v702 = vpop.f32.mrb[0].mxu0
    %703 = vmatprep.mubr.f32.mxu0 0.0
    %704 = vmatmul.mubr.f32.gmra.mrb[0].mxu0 %v622
    %v705 = vpop.f32.mrb[0].mxu0
    %v706 = vadd.f32 0.0, %v705
    %v707 = vpop.f32.mrb[0].mxu0
    %708 = vdwg.mxu0
    %v709 = vadd.f32 %v606, %v691
    %v710 = vadd.f32 %v607, %v696
    %v711 = vadd.f32 %v608, %v701
    %v712 = vadd.f32 %v609, %v706
    %v713 = vrot.slane %v483, 1
    %v714 = vrot.slane %v484, 1
    %v715 = vrot.slane %v485, 1
    %v716 = vrot.slane %v486, 1
    %v717 = vsel %vm348, %v715, %v716
    %v718 = vsel %vm348, %v714, %v715
    %v719 = vsel %vm348, %v713, %v714
    %v720 = vsel %vm348, %v716, %v713
    %v721 = vsel %vm369, %v719, 0.0
    %v722 = vsel %vm370, %v718, 0.0
    %v723 = vsel %vm371, %v717, 0.0
    %v724 = vsel %vm372, %v720, 0.0
    %s725 = scalar_lea.vmem %s3, 16
    %v726 = vld [vmem:[%s725] sm:$0xff]
    %v728 = vsel %vm508, %v721, 0
    %v731 = vsel %vm508, %v722, 0
    %v734 = vsel %vm508, %v723, 0
    %v737 = vsel %vm508, %v724, 0
    %739 = vmatprep.subr.mxu0 0.0
    %740 = vmatpush1.msra.mxu0 %v726
    %741 = vmatprep.subr.mxu0 0.0
    %742 = vmatpush1.msra.mxu0 0.0
    %743 = vmatprep.subr.mxu0 0.0
    %744 = vmatpush1.msra.mxu0 0.0
    %745 = vmatprep.subr.mxu0 0.0
    %746 = vmatpush1.msra.mxu0 0.0
    %747 = vmatprep.subr.mxu0 0.0
    %748 = vmatpush1.msra.mxu0 0.0
    %749 = vmatprep.subr.mxu0 0.0
    %750 = vmatpush1.msra.mxu0 0.0
    %751 = vmatprep.subr.mxu0 0.0
    %752 = vmatpush1.msra.mxu0 0.0
    %753 = vmatprep.subr.mxu0 0.0
    %754 = vmatpush1.msra.mxu0 0.0
    %755 = vmatprep.subr.mxu0 0.0
    %756 = vmatpush1.msra.mxu0 0.0
    %757 = vmatprep.subr.mxu0 0.0
    %758 = vmatpush1.msra.mxu0 0.0
    %759 = vmatprep.subr.mxu0 0.0
    %760 = vmatpush1.msra.mxu0 0.0
    %761 = vmatprep.subr.mxu0 0.0
    %762 = vmatpush1.msra.mxu0 0.0
    %763 = vmatprep.subr.mxu0 0.0
    %764 = vmatpush1.msra.mxu0 0.0
    %765 = vmatprep.subr.mxu0 0.0
    %766 = vmatpush1.msra.mxu0 0.0
    %767 = vmatprep.subr.mxu0 0.0
    %768 = vmatpush1.msra.mxu0 0.0
    %769 = vmatprep.subr.mxu0 0.0
    %770 = vmatpush1.msra.mxu0 0.0
    %771 = vmatprep.subr.mxu0 0.0
    %772 = vmatpush1.msra.mxu0 0.0
    %773 = vmatprep.subr.mxu0 0.0
    %774 = vmatpush1.msra.mxu0 0.0
    %775 = vmatprep.subr.mxu0 0.0
    %776 = vmatpush1.msra.mxu0 0.0
    %777 = vmatprep.subr.mxu0 0.0
    %778 = vmatpush1.msra.mxu0 0.0
    %779 = vmatprep.subr.mxu0 0.0
    %780 = vmatpush1.msra.mxu0 0.0
    %781 = vmatprep.subr.mxu0 0.0
    %782 = vmatpush1.msra.mxu0 0.0
    %783 = vmatprep.subr.mxu0 0.0
    %784 = vmatpush1.msra.mxu0 0.0
    %785 = vmatprep.subr.mxu0 0.0
    %786 = vmatpush1.msra.mxu0 0.0
    %787 = vmatprep.subr.mxu0 0.0
    %788 = vmatpush1.msra.mxu0 0.0
    %789 = vmatprep.subr.mxu0 0.0
    %790 = vmatpush1.msra.mxu0 0.0
    %791 = vmatprep.subr.mxu0 0.0
    %792 = vmatpush1.msra.mxu0 0.0
    %793 = vmatprep.subr.mxu0 0.0
    %794 = vmatpush1.msra.mxu0 0.0
    %795 = vmatprep.subr.mxu0 0.0
    %796 = vmatpush1.msra.mxu0 0.0
    %797 = vmatprep.subr.mxu0 0.0
    %798 = vmatpush1.msra.mxu0 0.0
    %799 = vmatprep.subr.mxu0 0.0
    %800 = vmatpush1.msra.mxu0 0.0
    %801 = vmatprep.subr.mxu0 0.0
    %802 = vmatpush1.msra.mxu0 0.0
    %803 = vmatprep.mubr.f32.mxu0 0.0
    %804 = vmatmul.mubr.f32.gmra.mrb[0].mxu0 %v728
    %v805 = vpop.f32.mrb[0].mxu0
    %v806 = vadd.f32 0.0, %v805
    %v807 = vpop.f32.mrb[0].mxu0
    %808 = vmatprep.mubr.f32.mxu0 0.0
    %809 = vmatmul.mubr.f32.gmra.mrb[0].mxu0 %v731
    %v810 = vpop.f32.mrb[0].mxu0
    %v811 = vadd.f32 0.0, %v810
    %v812 = vpop.f32.mrb[0].mxu0
    %813 = vmatprep.mubr.f32.mxu0 0.0
    %814 = vmatmul.mubr.f32.gmra.mrb[0].mxu0 %v734
    %v815 = vpop.f32.mrb[0].mxu0
    %v816 = vadd.f32 0.0, %v815
    %v817 = vpop.f32.mrb[0].mxu0
    %818 = vmatprep.mubr.f32.mxu0 0.0
    %819 = vmatmul.mubr.f32.gmra.mrb[0].mxu0 %v737
    %v820 = vpop.f32.mrb[0].mxu0
    %v821 = vadd.f32 0.0, %v820
    %v822 = vpop.f32.mrb[0].mxu0
    %823 = vdwg.mxu0
    %v824 = vadd.f32 %v709, %v806
    %v825 = vadd.f32 %v710, %v811
    %v826 = vadd.f32 %v711, %v816
    %v827 = vadd.f32 %v712, %v821
    %v828 = vmax.f32 %v824, 0.0
    %v829 = vmax.f32 %v825, 0.0
    %v830 = vmax.f32 %v826, 0.0
    %v831 = vmax.f32 %v827, 0.0
    %vm832 = vcmask 130048
    %v833 = vsel %vm832, %v828, 0.0
    %v834 = vsel %vm832, %v829, 0.0
    %v835 = vadd.f32 %v833, %v834
    %v836 = vrot.slane %v835, 4
    %v837 = vadd.f32 %v835, %v836
    %v838 = vrot.slane %v837, 2
    %v839 = vadd.f32 %v837, %v838
    %v840 = vrot.slane %v839, 1
    %v841 = vadd.f32 %v839, %v840
    %v842 = vsel %vm832, %v830, 0.0
    %v843 = vsel %vm832, %v831, 0.0
    %v844 = vadd.f32 %v842, %v843
    %v845 = vrot.slane %v844, 4
    %v846 = vadd.f32 %v844, %v845
    %v847 = vrot.slane %v846, 2
    %v848 = vadd.f32 %v846, %v847
    %v849 = vrot.slane %v848, 1
    %v850 = vadd.f32 %v848, %v849
    %v851 = vmul.f32 %v841, 0.0625
    %v852 = vmul.f32 %v850, 0.0625
    %v853 = vld [vmem:[%s5] sm:$0xff]
    %v854 = vld [vmem:[%s5 + $0x8] sm:$0xff]
    %v855 = vld [vmem:[%s6] sm:$0x1]
    %v857 = vlaneseq
    %v858 = vshrl.u32 %v857, 7
    %v859 = vsub.s32 0, %v858
    %v860 = vrot.slane %v855, %v859
    %vm864 = vcmask 1041409
    %v865 = vsel %vm864, %v852, %v851
    %v866 = vsel %vm832, %v865, 0
    %868 = vmatprep.subr.mxu0 0.0
    %869 = vmatpush1.msra.mxu0 %v853
    %870 = vmatprep.subr.mxu0 0.0
    %871 = vmatpush1.msra.mxu0 %v854
    %872 = vmatprep.subr.mxu0 0.0
    %873 = vmatpush1.msra.mxu0 0.0
    %874 = vmatprep.subr.mxu0 0.0
    %875 = vmatpush1.msra.mxu0 0.0
    %876 = vmatprep.subr.mxu0 0.0
    %877 = vmatpush1.msra.mxu0 0.0
    %878 = vmatprep.subr.mxu0 0.0
    %879 = vmatpush1.msra.mxu0 0.0
    %880 = vmatprep.subr.mxu0 0.0
    %881 = vmatpush1.msra.mxu0 0.0
    %882 = vmatprep.subr.mxu0 0.0
    %883 = vmatpush1.msra.mxu0 0.0
    %884 = vmatprep.subr.mxu0 0.0
    %885 = vmatpush1.msra.mxu0 0.0
    %886 = vmatprep.subr.mxu0 0.0
    %887 = vmatpush1.msra.mxu0 0.0
    %888 = vmatprep.subr.mxu0 0.0
    %889 = vmatpush1.msra.mxu0 0.0
    %890 = vmatprep.subr.mxu0 0.0
    %891 = vmatpush1.msra.mxu0 0.0
    %892 = vmatprep.subr.mxu0 0.0
    %893 = vmatpush1.msra.mxu0 0.0
    %894 = vmatprep.subr.mxu0 0.0
    %895 = vmatpush1.msra.mxu0 0.0
    %896 = vmatprep.subr.mxu0 0.0
    %897 = vmatpush1.msra.mxu0 0.0
    %898 = vmatprep.subr.mxu0 0.0
    %899 = vmatpush1.msra.mxu0 0.0
    %900 = vmatprep.subr.mxu0 0.0
    %901 = vmatpush1.msra.mxu0 0.0
    %902 = vmatprep.subr.mxu0 0.0
    %903 = vmatpush1.msra.mxu0 0.0
    %904 = vmatprep.subr.mxu0 0.0
    %905 = vmatpush1.msra.mxu0 0.0
    %906 = vmatprep.subr.mxu0 0.0
    %907 = vmatpush1.msra.mxu0 0.0
    %908 = vmatprep.subr.mxu0 0.0
    %909 = vmatpush1.msra.mxu0 0.0
    %910 = vmatprep.subr.mxu0 0.0
    %911 = vmatpush1.msra.mxu0 0.0
    %912 = vmatprep.subr.mxu0 0.0
    %913 = vmatpush1.msra.mxu0 0.0
    %914 = vmatprep.subr.mxu0 0.0
    %915 = vmatpush1.msra.mxu0 0.0
    %916 = vmatprep.subr.mxu0 0.0
    %917 = vmatpush1.msra.mxu0 0.0
    %918 = vmatprep.subr.mxu0 0.0
    %919 = vmatpush1.msra.mxu0 0.0
    %920 = vmatprep.subr.mxu0 0.0
    %921 = vmatpush1.msra.mxu0 0.0
    %922 = vmatprep.subr.mxu0 0.0
    %923 = vmatpush1.msra.mxu0 0.0
    %924 = vmatprep.subr.mxu0 0.0
    %925 = vmatpush1.msra.mxu0 0.0
    %926 = vmatprep.subr.mxu0 0.0
    %927 = vmatpush1.msra.mxu0 0.0
    %928 = vmatprep.subr.mxu0 0.0
    %929 = vmatpush1.msra.mxu0 0.0
    %930 = vmatprep.subr.mxu0 0.0
    %931 = vmatpush1.msra.mxu0 0.0
    %932 = vmatprep.mubr.f32.mxu0 0.0
    %933 = vmatmul.mubr.f32.gmra.mrb[0].mxu0 %v866
    %v934 = vpop.f32.mrb[0].mxu0
    %v935 = vadd.f32 %v860, %v934
    %v936 = vpop.f32.mrb[0].mxu0
    %937 = vdwg.mxu0
    %v938 = vmax.f32 %v935, 0.0
    %v939 = vld [vmem:[%s7] sm:$0xff]
    %v940 = vld [vmem:[%s7 + $0x8] sm:$0xff]
    %v941 = vld [vmem:[%s7 + $0x10] sm:$0xff]
    %v942 = vld [vmem:[%s7 + $0x18] sm:$0xff]
    %v943 = vld [vmem:[%s8] sm:$0x1]
    %v945 = vlaneseq
    %v946 = vshrl.u32 %v945, 7
    %v947 = vsub.s32 0, %v946
    %v948 = vrot.slane %v943, %v947
    %vm950 = vcmask 261120
    %v952 = vsel %vm950, %v938, 0
    %954 = vmatprep.subr.mxu0 0.0
    %955 = vmatpush1.msra.mxu0 %v939
    %956 = vmatprep.subr.mxu0 0.0
    %957 = vmatpush1.msra.mxu0 %v940
    %958 = vmatprep.subr.mxu0 0.0
    %959 = vmatpush1.msra.mxu0 %v941
    %960 = vmatprep.subr.mxu0 0.0
    %961 = vmatpush1.msra.mxu0 %v942
    %962 = vmatprep.subr.mxu0 0.0
    %963 = vmatpush1.msra.mxu0 0.0
    %964 = vmatprep.subr.mxu0 0.0
    %965 = vmatpush1.msra.mxu0 0.0
    %966 = vmatprep.subr.mxu0 0.0
    %967 = vmatpush1.msra.mxu0 0.0
    %968 = vmatprep.subr.mxu0 0.0
    %969 = vmatpush1.msra.mxu0 0.0
    %970 = vmatprep.subr.mxu0 0.0
    %971 = vmatpush1.msra.mxu0 0.0
    %972 = vmatprep.subr.mxu0 0.0
    %973 = vmatpush1.msra.mxu0 0.0
    %974 = vmatprep.subr.mxu0 0.0
    %975 = vmatpush1.msra.mxu0 0.0
    %976 = vmatprep.subr.mxu0 0.0
    %977 = vmatpush1.msra.mxu0 0.0
    %978 = vmatprep.subr.mxu0 0.0
    %979 = vmatpush1.msra.mxu0 0.0
    %980 = vmatprep.subr.mxu0 0.0
    %981 = vmatpush1.msra.mxu0 0.0
    %982 = vmatprep.subr.mxu0 0.0
    %983 = vmatpush1.msra.mxu0 0.0
    %984 = vmatprep.subr.mxu0 0.0
    %985 = vmatpush1.msra.mxu0 0.0
    %986 = vmatprep.subr.mxu0 0.0
    %987 = vmatpush1.msra.mxu0 0.0
    %988 = vmatprep.subr.mxu0 0.0
    %989 = vmatpush1.msra.mxu0 0.0
    %990 = vmatprep.subr.mxu0 0.0
    %991 = vmatpush1.msra.mxu0 0.0
    %992 = vmatprep.subr.mxu0 0.0
    %993 = vmatpush1.msra.mxu0 0.0
    %994 = vmatprep.subr.mxu0 0.0
    %995 = vmatpush1.msra.mxu0 0.0
    %996 = vmatprep.subr.mxu0 0.0
    %997 = vmatpush1.msra.mxu0 0.0
    %998 = vmatprep.subr.mxu0 0.0
    %999 = vmatpush1.msra.mxu0 0.0
    %1000 = vmatprep.subr.mxu0 0.0
    %1001 = vmatpush1.msra.mxu0 0.0
    %1002 = vmatprep.subr.mxu0 0.0
    %1003 = vmatpush1.msra.mxu0 0.0
    %1004 = vmatprep.subr.mxu0 0.0
    %1005 = vmatpush1.msra.mxu0 0.0
    %1006 = vmatprep.subr.mxu0 0.0
    %1007 = vmatpush1.msra.mxu0 0.0
    %1008 = vmatprep.subr.mxu0 0.0
    %1009 = vmatpush1.msra.mxu0 0.0
    %1010 = vmatprep.subr.mxu0 0.0
    %1011 = vmatpush1.msra.mxu0 0.0
    %1012 = vmatprep.subr.mxu0 0.0
    %1013 = vmatpush1.msra.mxu0 0.0
    %1014 = vmatprep.subr.mxu0 0.0
    %1015 = vmatpush1.msra.mxu0 0.0
    %1016 = vmatprep.subr.mxu0 0.0
    %1017 = vmatpush1.msra.mxu0 0.0
    %1018 = vmatprep.mubr.f32.mxu0 0.0
    %1019 = vmatmul.mubr.f32.gmra.mrb[0].mxu0 %v952
    %v1020 = vpop.f32.mrb[0].mxu0
    %v1021 = vadd.f32 %v948, %v1020
    %v1022 = vpop.f32.mrb[0].mxu0
    %1023 = vdwg.mxu0
    %v1026 = vunpack.c.l.s4 1966171168
    %v1027 = vunpack.c.0.s8 %v1026
    %v1028 = vlaneseq
    %v1029 = vshrl.u32 %v1028, 7
    %v1030 = vsub.s32 %v1027, %v1029
    %v1031 = vrot.slane %v1021, %v1030
    %v1032 = vcombine.high %v1031, %v1031
    %v1034 = vunpack.c.l.s4 1966171168
    %v1035 = vunpack.c.0.s8 %v1034
    %v1036 = vlaneseq
    %v1037 = vshrl.u32 %v1036, 7
    %v1038 = vsub.s32 %v1035, %v1037
    %v1039 = vrot.slane %v1031, %v1038
    %v1041 = vunpack.c.l.s4 1966171168
    %v1042 = vunpack.c.0.s8 %v1041
    %v1043 = vlaneseq
    %v1044 = vshrl.u32 %v1043, 7
    %v1045 = vsub.s32 %v1042, %v1044
    %v1046 = vrot.slane %v1032, %v1045
    %vm1049 = vcmask 73728
    %1050 = vst.msk [vmem:[#allocation2] sm:$0x1] %vm1049, %v1039
    %1051 = vst.msk [vmem:[#allocation2 + $0x1] sm:$0x1] %vm1049, %v1046
    // Predicated region
    $region38: #{tpu_custom_call.1} parent=1 // pred_check
      _
    $region39: #{tpu_custom_call.1} parent=1 // pred_check_branch
      %1053 = sbr.rel (0) target = $region41
    $region40: #{tpu_custom_call.1} parent=1 // pred_region
      %s1055 = ssub.s32 32, 32
      %1056 = vsyncadd [#allocation3], %s1055
      %s1057 = sshll.u32 [#allocation2], 4
      %s1058 = int_to_ptr.vmem [resolvable:$true] %s1057
      %1063 = dma.vmem_to_hbm [thread:$0]  %s1058, 32, %s9, [#allocation3], 16, 16, 1
    $region41: #{tpu_custom_call.1} parent=1 // pred_fallthru
      _
    // Predicated region
    $region42: #{tpu_custom_call.1} parent=1 // pred_check
      _
    $region43: #{tpu_custom_call.1} parent=1 // pred_check_branch
      %1065 = sbr.rel (0) target = $region45
    $region44: #{tpu_custom_call.1} parent=1 // pred_region
      %1066 = dma.done [#allocation3], 32
    $region45: #{tpu_custom_call.1} parent=1 // pred_fallthru
      _
    %1067 = vsyncpa [#allocation3], 1

</llo_original>
